<compile_context>
chip_gen: v7x
topology: tpu7x:2x2x1
jax: 0.10.0
libtpu: 0.0.40
codegen_flags: <defaults>
</compile_context>

<pallas_src>
import functools

import jax
import jax.numpy as jnp
from jax.experimental import pallas as pl
from jax.experimental.pallas import tpu as pltpu


def _round_up(x, m):
    return ((x + m - 1) // m) * m


def _pick_batch_tile(B, block_b):
    """Batch tile: 16-aligned (bf16 sublanes), prefers a divisor of B, >=2 grid steps if big."""
    tb = min(block_b, _round_up(max(B, 1), 16))
    if B > tb:
        start = tb - tb % 16
        for t in range(start, 15, -16):      # prefer a tile that divides B -> no wrapper pad
            if B % t == 0:
                return t
        return tb
    if tb >= 256 and tb % 32 == 0:            # whole batch fits one tile: split so v7x's
        return tb // 2                        # two TensorCores both get a grid step
    return tb


def _vmem_budget_bytes(tb, input_size, H, C_pad):
    x_buf = 2 * tb * input_size * 4                         # double-buffered f32 input tile
    out_buf = 2 * tb * C_pad * 2                            # double-buffered bf16 output tile
    w_buf = 2 * ((input_size * 3 * H + H * 3 * H + H * C_pad) * 2
                 + (2 * 3 * H + C_pad) * 4)                 # resident weights/biases (2 bufs)
    live = 8 * tb * 3 * H * 4                               # f32 gate intermediates headroom
    total = int(1.5 * (x_buf + out_buf + w_buf + live))
    return min(max(total, 16 * 1024 * 1024), 48 * 1024 * 1024)   # stay under v7x's 64 MiB


def _lstm_fc_kernel(x_ref, wih0_ref, b0_ref, wih1_ref, b1_ref, wfc_ref, bfc_ref,
                    out_ref, *, hidden_size):
    H = hidden_size

    def cell(inp_bf16, w_ref, b_ref):
        # gates layout along lanes: [i | g | o] (forget gate already removed from the weights).
        gates = jnp.dot(inp_bf16, w_ref[...],
                        preferred_element_type=jnp.float32) + b_ref[...]
        if H % 128 == 0:
            # vreg-aligned slices: transcendentals only on live lanes (3H EUP lanes total).
            i = jax.nn.sigmoid(gates[:, 0:H])
            g = jnp.tanh(gates[:, H:2 * H])
            o = jax.nn.sigmoid(gates[:, 2 * H:3 * H])
        else:
            # sub-vreg H: two full-width passes then slice (avoids masked sub-vreg EUP ops).
            sig = jax.nn.sigmoid(gates)
            tnh = jnp.tanh(gates)
            i, g, o = sig[:, 0:H], tnh[:, H:2 * H], sig[:, 2 * H:3 * H]
        c = i * g                                    # c_{t-1} == 0  =>  c = i * g
        return o * jnp.tanh(c)

    x = x_ref[...].astype(jnp.bfloat16)              # x read once from HBM as f32, cast in-vreg
    h0 = cell(x, wih0_ref, b0_ref)                   # LSTM layer 0 (single timestep)
    h1 = cell(h0.astype(jnp.bfloat16), wih1_ref, b1_ref)   # LSTM layer 1

    # Final fully-connected layer; lane-dense padded columns, f32 epilogue, bf16 store.
    out = jnp.dot(h1.astype(jnp.bfloat16), wfc_ref[...],
                  preferred_element_type=jnp.float32) + bfc_ref[...]
    out_ref[...] = out.astype(out_ref.dtype)


def lstm_model_forward(x, params, hidden_size, num_classes, *, block_b=1024):
    """x: (B, input_size) f32 — the module's forward does x.unsqueeze(1), i.e. seq_len == 1."""
    B, input_size = x.shape
    H = hidden_size
    C_pad = params["w_fc"].shape[1]                  # already padded to a multiple of 128 at init

    tb = _pick_batch_tile(B, block_b)
    B_pad = _round_up(B, tb)
    x_p = x if B_pad == B else jnp.pad(x, ((0, B_pad - B), (0, 0)))

    kernel = functools.partial(_lstm_fc_kernel, hidden_size=H)
    resident = lambda i: (0, 0)   # weights/biases: same block every grid step -> stay in VMEM

    out = pl.pallas_call(
        kernel,
        out_shape=jax.ShapeDtypeStruct((B_pad, C_pad), jnp.bfloat16),
        grid=(B_pad // tb,),
        in_specs=[
            pl.BlockSpec((tb, input_size), lambda i: (i, 0)),   # x tile (f32)
            pl.BlockSpec((input_size, 3 * H), resident),        # w_ih_l0 [i|g|o] bf16
            pl.BlockSpec((1, 3 * H), resident),                 # b_l0 f32
            pl.BlockSpec((H, 3 * H), resident),                 # w_ih_l1 bf16
            pl.BlockSpec((1, 3 * H), resident),                 # b_l1 f32
            pl.BlockSpec((H, C_pad), resident),                 # w_fc (padded) bf16
            pl.BlockSpec((1, C_pad), resident),                 # b_fc (padded) f32
        ],
        out_specs=pl.BlockSpec((tb, C_pad), lambda i: (i, 0)),
        compiler_params=pltpu.CompilerParams(
            dimension_semantics=("parallel",),                  # batch tiles shard across TCs
            vmem_limit_bytes=_vmem_budget_bytes(tb, input_size, H, C_pad),
        ),
    )(x_p,
      params["w_ih_l0"], params["b_l0"],
      params["w_ih_l1"], params["b_l1"],
      params["w_fc"], params["b_fc"])

    return out[:B, :num_classes]


def init_params(key, input_size, hidden_size, num_classes):
    """Deterministic synthetic params, PyTorch-like uniform(-1/sqrt(H), 1/sqrt(H)).

    One-time preprocessing (so the per-call device work is only the pallas_call):
      * forget-gate rows dropped (gate order [i | g | o]), weights transposed + bf16,
      * b_ih + b_hh folded (h0 = c0 = 0 makes the W_hh contribution exactly zero),
      * w_fc / b_fc zero-padded to a 128-lane-multiple column count, w_fc cast to bf16.
    """
    H = hidden_size
    k = 1.0 / jnp.sqrt(jnp.float32(H))
    keys = jax.random.split(key, 8)
    u = lambda kk, shape: jax.random.uniform(kk, shape, jnp.float32, -k, k)

    # PyTorch layout: weight_ih_l{l}: (4H, in), biases: (4H,), gate order [i, f, g, o].
    w_ih_l0 = u(keys[0], (4 * H, input_size))
    b_ih_l0 = u(keys[1], (4 * H,))
    b_hh_l0 = u(keys[2], (4 * H,))
    w_ih_l1 = u(keys[3], (4 * H, H))
    b_ih_l1 = u(keys[4], (4 * H,))
    b_hh_l1 = u(keys[5], (4 * H,))
    w_fc = u(keys[6], (num_classes, H))
    b_fc = u(keys[7], (num_classes,))

    keep = jnp.concatenate([jnp.arange(0, H), jnp.arange(2 * H, 4 * H)])   # [i | g | o]

    C_pad = _round_up(num_classes, 128)
    w_fc_p = jnp.zeros((H, C_pad), jnp.bfloat16).at[:, :num_classes].set(
        w_fc.T.astype(jnp.bfloat16))
    b_fc_p = jnp.zeros((1, C_pad), jnp.float32).at[0, :num_classes].set(b_fc)

    return {
        "w_ih_l0": w_ih_l0[keep].T.astype(jnp.bfloat16),    # (input_size, 3H) bf16
        "b_l0": (b_ih_l0 + b_hh_l0)[keep][None, :],         # (1, 3H) f32
        "w_ih_l1": w_ih_l1[keep].T.astype(jnp.bfloat16),    # (H, 3H) bf16
        "b_l1": (b_ih_l1 + b_hh_l1)[keep][None, :],         # (1, 3H) f32
        "w_fc": w_fc_p,                                     # (H, C_pad) bf16, padded once
        "b_fc": b_fc_p,                                     # (1, C_pad) f32, padded once
    }


def reference_forward(x, params, hidden_size, num_classes):
    """Pure-JAX reference matching nn.LSTM(seq_len=1, zero init) + Linear, mirroring the
    kernel's bf16 matmul operands / f32 accumulation so the comparison is apples-to-apples."""
    H = hidden_size
    f32 = lambda a: a.astype(jnp.float32)

    def cell(inp_bf16, w_bf16, b_f32):
        gates = f32(inp_bf16) @ f32(w_bf16) + b_f32
        i = jax.nn.sigmoid(gates[:, 0:H])
        g = jnp.tanh(gates[:, H:2 * H])
        o = jax.nn.sigmoid(gates[:, 2 * H:3 * H])
        return o * jnp.tanh(i * g)

    h0 = cell(x.astype(jnp.bfloat16), params["w_ih_l0"], params["b_l0"])
    h1 = cell(h0.astype(jnp.bfloat16), params["w_ih_l1"], params["b_l1"])
    out = f32(h1.astype(jnp.bfloat16)) @ f32(params["w_fc"]) + params["b_fc"]
    return out[:, :num_classes]


if __name__ == "__main__":
    batch = 2
    input_size = 16
    hidden_size = 32
    num_classes = 8

    key = jax.random.PRNGKey(0)
    kx, kp = jax.random.split(key)
    x = jax.random.normal(kx, (batch, input_size), dtype=jnp.float32)
    params = init_params(kp, input_size, hidden_size, num_classes)

    out = lstm_model_forward(x, params, hidden_size, num_classes)
    out = jax.block_until_ready(out)

    ref = reference_forward(x, params, hidden_size, num_classes)
    assert out.shape == (batch, num_classes)
    assert jnp.allclose(out.astype(jnp.float32), ref, atol=1e-2, rtol=1e-2), \
        "kernel mismatch vs reference"

    print("KERNEL_OK")
</pallas_src>

<mosaic_0001>
module attributes {stable_mosaic.version = 11 : i64} {
  func.func @_lstm_fc_kernel(%arg0: i32, %arg1: memref<16x16xf32, #tpu.memory_space<vmem>>, %arg2: memref<16x96xbf16, #tpu.memory_space<vmem>>, %arg3: memref<1x96xf32, #tpu.memory_space<vmem>>, %arg4: memref<32x96xbf16, #tpu.memory_space<vmem>>, %arg5: memref<1x96xf32, #tpu.memory_space<vmem>>, %arg6: memref<32x128xbf16, #tpu.memory_space<vmem>>, %arg7: memref<1x128xf32, #tpu.memory_space<vmem>>, %arg8: memref<16x128xbf16, #tpu.memory_space<vmem>>) attributes {dimension_semantics = [#tpu.dimension_semantics<parallel>], iteration_bounds = array<i64: 1>, scalar_prefetch = 0 : i64, scratch_operands = 0 : i64, tpu.core_type = #tpu.core_type<tc>, window_params = [{transform_indices = @transform_0, window_bounds = array<i64: 16, 16>}, {pipeline_mode = #tpu.pipeline_mode<synchronous>, transform_indices = @transform_1, window_bounds = array<i64: 16, 96>}, {pipeline_mode = #tpu.pipeline_mode<synchronous>, transform_indices = @transform_2, window_bounds = array<i64: 1, 96>}, {pipeline_mode = #tpu.pipeline_mode<synchronous>, transform_indices = @transform_3, window_bounds = array<i64: 32, 96>}, {pipeline_mode = #tpu.pipeline_mode<synchronous>, transform_indices = @transform_4, window_bounds = array<i64: 1, 96>}, {pipeline_mode = #tpu.pipeline_mode<synchronous>, transform_indices = @transform_5, window_bounds = array<i64: 32, 128>}, {pipeline_mode = #tpu.pipeline_mode<synchronous>, transform_indices = @transform_6, window_bounds = array<i64: 1, 128>}, {transform_indices = @transform_7, window_bounds = array<i64: 16, 128>}]} {
    %c0 = arith.constant 0 : index
    %c0_0 = arith.constant 0 : index
    %0 = vector.load %arg1[%c0, %c0_0] : memref<16x16xf32, #tpu.memory_space<vmem>>, vector<16x16xf32>
    %1 = arith.truncf %0 : vector<16x16xf32> to vector<16x16xbf16>
    %c0_1 = arith.constant 0 : index
    %c0_2 = arith.constant 0 : index
    %2 = vector.load %arg2[%c0_1, %c0_2] : memref<16x96xbf16, #tpu.memory_space<vmem>>, vector<16x96xbf16>
    %cst = arith.constant dense<0.000000e+00> : vector<16x96xf32>
    %3 = tpu.matmul %1, %2, %cst {dimension_numbers = #tpu.dot_dimension_numbers<[1], [0], [0], [1], [0, 0, 1, 1], [], []>} : vector<16x16xbf16>, vector<16x96xbf16>, vector<16x96xf32> -> vector<16x96xf32>
    %c0_3 = arith.constant 0 : index
    %c0_4 = arith.constant 0 : index
    %4 = vector.load %arg3[%c0_3, %c0_4] : memref<1x96xf32, #tpu.memory_space<vmem>>, vector<1x96xf32>
    %5 = vector.broadcast %4 : vector<1x96xf32> to vector<16x96xf32>
    %6 = arith.addf %3, %5 : vector<16x96xf32>
    %7 = arith.negf %6 : vector<16x96xf32>
    %8 = math.exp %7 : vector<16x96xf32>
    %cst_5 = arith.constant 1.000000e+00 : f32
    %9 = vector.broadcast %cst_5 : f32 to vector<16x96xf32>
    %10 = arith.addf %9, %8 : vector<16x96xf32>
    %11 = arith.divf %9, %10 : vector<16x96xf32>
    %12 = math.tanh %6 : vector<16x96xf32>
    %13 = vector.extract_strided_slice %11 {offsets = [0, 0], sizes = [16, 32], strides = [1, 1]} : vector<16x96xf32> to vector<16x32xf32>
    %14 = vector.extract_strided_slice %12 {offsets = [0, 32], sizes = [16, 32], strides = [1, 1]} : vector<16x96xf32> to vector<16x32xf32>
    %15 = vector.extract_strided_slice %11 {offsets = [0, 64], sizes = [16, 32], strides = [1, 1]} : vector<16x96xf32> to vector<16x32xf32>
    %16 = arith.mulf %13, %14 : vector<16x32xf32>
    %17 = math.tanh %16 : vector<16x32xf32>
    %18 = arith.mulf %15, %17 : vector<16x32xf32>
    %19 = arith.truncf %18 : vector<16x32xf32> to vector<16x32xbf16>
    %c0_6 = arith.constant 0 : index
    %c0_7 = arith.constant 0 : index
    %20 = vector.load %arg4[%c0_6, %c0_7] : memref<32x96xbf16, #tpu.memory_space<vmem>>, vector<32x96xbf16>
    %cst_8 = arith.constant dense<0.000000e+00> : vector<16x96xf32>
    %21 = tpu.matmul %19, %20, %cst_8 {dimension_numbers = #tpu.dot_dimension_numbers<[1], [0], [0], [1], [0, 0, 1, 1], [], []>} : vector<16x32xbf16>, vector<32x96xbf16>, vector<16x96xf32> -> vector<16x96xf32>
    %c0_9 = arith.constant 0 : index
    %c0_10 = arith.constant 0 : index
    %22 = vector.load %arg5[%c0_9, %c0_10] : memref<1x96xf32, #tpu.memory_space<vmem>>, vector<1x96xf32>
    %23 = vector.broadcast %22 : vector<1x96xf32> to vector<16x96xf32>
    %24 = arith.addf %21, %23 : vector<16x96xf32>
    %25 = arith.negf %24 : vector<16x96xf32>
    %26 = math.exp %25 : vector<16x96xf32>
    %cst_11 = arith.constant 1.000000e+00 : f32
    %27 = vector.broadcast %cst_11 : f32 to vector<16x96xf32>
    %28 = arith.addf %27, %26 : vector<16x96xf32>
    %29 = arith.divf %27, %28 : vector<16x96xf32>
    %30 = math.tanh %24 : vector<16x96xf32>
    %31 = vector.extract_strided_slice %29 {offsets = [0, 0], sizes = [16, 32], strides = [1, 1]} : vector<16x96xf32> to vector<16x32xf32>
    %32 = vector.extract_strided_slice %30 {offsets = [0, 32], sizes = [16, 32], strides = [1, 1]} : vector<16x96xf32> to vector<16x32xf32>
    %33 = vector.extract_strided_slice %29 {offsets = [0, 64], sizes = [16, 32], strides = [1, 1]} : vector<16x96xf32> to vector<16x32xf32>
    %34 = arith.mulf %31, %32 : vector<16x32xf32>
    %35 = math.tanh %34 : vector<16x32xf32>
    %36 = arith.mulf %33, %35 : vector<16x32xf32>
    %37 = arith.truncf %36 : vector<16x32xf32> to vector<16x32xbf16>
    %c0_12 = arith.constant 0 : index
    %c0_13 = arith.constant 0 : index
    %38 = vector.load %arg6[%c0_12, %c0_13] : memref<32x128xbf16, #tpu.memory_space<vmem>>, vector<32x128xbf16>
    %cst_14 = arith.constant dense<0.000000e+00> : vector<16x128xf32>
    %39 = tpu.matmul %37, %38, %cst_14 {dimension_numbers = #tpu.dot_dimension_numbers<[1], [0], [0], [1], [0, 0, 1, 1], [], []>} : vector<16x32xbf16>, vector<32x128xbf16>, vector<16x128xf32> -> vector<16x128xf32>
    %c0_15 = arith.constant 0 : index
    %c0_16 = arith.constant 0 : index
    %40 = vector.load %arg7[%c0_15, %c0_16] : memref<1x128xf32, #tpu.memory_space<vmem>>, vector<1x128xf32>
    %41 = vector.broadcast %40 : vector<1x128xf32> to vector<16x128xf32>
    %42 = arith.addf %39, %41 : vector<16x128xf32>
    %43 = arith.truncf %42 : vector<16x128xf32> to vector<16x128xbf16>
    %c0_17 = arith.constant 0 : index
    %c0_18 = arith.constant 0 : index
    %44 = vector.load %arg8[%c0_17, %c0_18] : memref<16x128xbf16, #tpu.memory_space<vmem>>, vector<16x128xbf16>
    tpu.vector_store %arg8[%c0_17, %c0_18], %43 {strides = array<i32>} : memref<16x128xbf16, #tpu.memory_space<vmem>>, vector<16x128xbf16>,
    return
  }
  func.func @transform_0(%arg0: i32) -> (i32, i32) {
    %c0_i32 = arith.constant 0 : i32
    %c0_i32_0 = arith.constant 0 : i32
    return %arg0, %c0_i32 : i32, i32
  }
  func.func @transform_1(%arg0: i32) -> (i32, i32) {
    %c0_i32 = arith.constant 0 : i32
    %c0_i32_0 = arith.constant 0 : i32
    %c0_i32_1 = arith.constant 0 : i32
    return %c0_i32, %c0_i32_0 : i32, i32
  }
  func.func @transform_2(%arg0: i32) -> (i32, i32) {
    %c0_i32 = arith.constant 0 : i32
    %c0_i32_0 = arith.constant 0 : i32
    %c0_i32_1 = arith.constant 0 : i32
    return %c0_i32, %c0_i32_0 : i32, i32
  }
  func.func @transform_3(%arg0: i32) -> (i32, i32) {
    %c0_i32 = arith.constant 0 : i32
    %c0_i32_0 = arith.constant 0 : i32
    %c0_i32_1 = arith.constant 0 : i32
    return %c0_i32, %c0_i32_0 : i32, i32
  }
  func.func @transform_4(%arg0: i32) -> (i32, i32) {
    %c0_i32 = arith.constant 0 : i32
    %c0_i32_0 = arith.constant 0 : i32
    %c0_i32_1 = arith.constant 0 : i32
    return %c0_i32, %c0_i32_0 : i32, i32
  }
  func.func @transform_5(%arg0: i32) -> (i32, i32) {
    %c0_i32 = arith.constant 0 : i32
    %c0_i32_0 = arith.constant 0 : i32
    %c0_i32_1 = arith.constant 0 : i32
    return %c0_i32, %c0_i32_0 : i32, i32
  }
  func.func @transform_6(%arg0: i32) -> (i32, i32) {
    %c0_i32 = arith.constant 0 : i32
    %c0_i32_0 = arith.constant 0 : i32
    %c0_i32_1 = arith.constant 0 : i32
    return %c0_i32, %c0_i32_0 : i32, i32
  }
  func.func @transform_7(%arg0: i32) -> (i32, i32) {
    %c0_i32 = arith.constant 0 : i32
    %c0_i32_0 = arith.constant 0 : i32
    return %arg0, %c0_i32 : i32, i32
  }
}

</mosaic_0001>

<llo_original>
// kernel: tpu_custom_call.1
$region0: #{tpu_custom_call.1}
  #allocation0 [shape = 'u32[]', space=smem, size = 0x4, offset = 0x4, fixed_abs, tag = 'smem constant byte address 0x4 - core index']
  #allocation1 [shape = 'u32[144,128]{1,0:T(1,128)}', space=vmem, size = 0x12000, scoped, tag = 'internal scratch']
  %s0 = inlined_call_operand.hbm [shape: f32[16,16], index: 0, kind: input, shape index: {}]
  %s1 = inlined_call_operand.hbm [shape: bf16[16,96], index: 1, kind: input, shape index: {}]
  %s2 = inlined_call_operand.vmem [shape: f32[1,96], index: 2, kind: input, shape index: {}]
  %s3 = inlined_call_operand.hbm [shape: bf16[32,96], index: 3, kind: input, shape index: {}]
  %s4 = inlined_call_operand.vmem [shape: f32[1,96], index: 4, kind: input, shape index: {}]
  %s5 = inlined_call_operand.vmem [shape: bf16[32,128], index: 5, kind: input, shape index: {}]
  %s6 = inlined_call_operand.vmem [shape: f32[1,128], index: 6, kind: input, shape index: {}]
  %s7 = inlined_call_operand.hbm [shape: bf16[16,128], index: 7, kind: output, shape index: {}]
  %s8 = sld [smem:[#allocation0]]
  $region50: #{tpu_custom_call.1} parent=0
    _
  %s10 = ssub.s32 1, %s8
  %s11 = scalar_select 0, %s10, %s8
  $region1: #{tpu_custom_call.1} parent=0
    #allocation2 [shape = 'u8[8192]{0}', space=vmem, size = 0x2000, scoped, tag = 'input window, operand 0, single buffered']
    #allocation3 [shape = 's32[1]{0}', space=sflag, size = 0x4, scoped, tag = 'scoped memory for tpu_custom_call.1']
    #allocation4 [shape = 's32[1]{0}', space=sflag, size = 0x4, scoped, tag = 'scoped memory for tpu_custom_call.1']
    #allocation5 [shape = 'u8[4096]{0}', space=vmem, size = 0x1000, scoped, tag = 'input window, operand 1, single buffered']
    #allocation6 [shape = 's32[1]{0}', space=sflag, size = 0x4, scoped, tag = 'scoped memory for tpu_custom_call.1']
    #allocation7 [shape = 'u8[8192]{0}', space=vmem, size = 0x2000, scoped, tag = 'input window, operand 3, single buffered']
    #allocation8 [shape = 'u8[4096]{0}', space=vmem, size = 0x1000, scoped, tag = 'output window, operand 0, single buffered']
    %12 = vsyncpa [#allocation3], 0
    %13 = vsyncpa [#allocation6], 0
    %14 = vsyncpa [#allocation4], 0
    // Predicated region
    $region2: #{tpu_custom_call.1} parent=1 // pred_check
      _
    $region3: #{tpu_custom_call.1} parent=1 // pred_check_branch
      %16 = sbr.rel (0) target = $region5
    $region4: #{tpu_custom_call.1} parent=1 // pred_region
      %s18 = ssub.s32 256, 256
      %19 = vsyncadd [#allocation3], %s18
      %s20 = sshll.u32 [#allocation2], 4
      %s21 = int_to_ptr.vmem [resolvable:$true] %s20
      %26 = dma.hbm_to_vmem [thread:$0]  %s0, 256, %s21, [#allocation3], 128, 128, 8
    $region5: #{tpu_custom_call.1} parent=1 // pred_fallthru
      _
    // Predicated region
    $region6: #{tpu_custom_call.1} parent=1 // pred_check
      _
    $region7: #{tpu_custom_call.1} parent=1 // pred_check_branch
      %28 = sbr.rel (0) target = $region9
    $region8: #{tpu_custom_call.1} parent=1 // pred_region
      %s30 = ssub.s32 128, 128
      %31 = vsyncadd [#allocation6], %s30
      %s32 = sshll.u32 [#allocation5], 4
      %s33 = int_to_ptr.vmem [resolvable:$true] %s32
      %38 = dma.hbm_to_vmem [thread:$0]  %s1, 128, %s33, [#allocation6], 64, 64, 4
    $region9: #{tpu_custom_call.1} parent=1 // pred_fallthru
      _
    // Predicated region
    $region10: #{tpu_custom_call.1} parent=1 // pred_check
      _
    $region11: #{tpu_custom_call.1} parent=1 // pred_check_branch
      %40 = sbr.rel (0) target = $region13
    $region12: #{tpu_custom_call.1} parent=1 // pred_region
      _
    $region13: #{tpu_custom_call.1} parent=1 // pred_fallthru
      _
    // Predicated region
    $region14: #{tpu_custom_call.1} parent=1 // pred_check
      _
    $region15: #{tpu_custom_call.1} parent=1 // pred_check_branch
      %42 = sbr.rel (0) target = $region17
    $region16: #{tpu_custom_call.1} parent=1 // pred_region
      %s44 = ssub.s32 256, 256
      %45 = vsyncadd [#allocation6], %s44
      %s46 = sshll.u32 [#allocation7], 4
      %s47 = int_to_ptr.vmem [resolvable:$true] %s46
      %52 = dma.hbm_to_vmem [thread:$0]  %s3, 256, %s47, [#allocation6], 64, 64, 4
    $region17: #{tpu_custom_call.1} parent=1 // pred_fallthru
      _
    // Predicated region
    $region18: #{tpu_custom_call.1} parent=1 // pred_check
      _
    $region19: #{tpu_custom_call.1} parent=1 // pred_check_branch
      %54 = sbr.rel (0) target = $region21
    $region20: #{tpu_custom_call.1} parent=1 // pred_region
      _
    $region21: #{tpu_custom_call.1} parent=1 // pred_fallthru
      _
    // Predicated region
    $region22: #{tpu_custom_call.1} parent=1 // pred_check
      _
    $region23: #{tpu_custom_call.1} parent=1 // pred_check_branch
      %56 = sbr.rel (0) target = $region25
    $region24: #{tpu_custom_call.1} parent=1 // pred_region
      _
    $region25: #{tpu_custom_call.1} parent=1 // pred_fallthru
      _
    // Predicated region
    $region26: #{tpu_custom_call.1} parent=1 // pred_check
      _
    $region27: #{tpu_custom_call.1} parent=1 // pred_check_branch
      %58 = sbr.rel (0) target = $region29
    $region28: #{tpu_custom_call.1} parent=1 // pred_region
      _
    $region29: #{tpu_custom_call.1} parent=1 // pred_fallthru
      _
    // Predicated region
    $region30: #{tpu_custom_call.1} parent=1 // pred_check
      _
    $region31: #{tpu_custom_call.1} parent=1 // pred_check_branch
      %60 = sbr.rel (0) target = $region33
    $region32: #{tpu_custom_call.1} parent=1 // pred_region
      %61 = dma.done [#allocation3], 256
    $region33: #{tpu_custom_call.1} parent=1 // pred_fallthru
      _
    // Predicated region
    $region34: #{tpu_custom_call.1} parent=1 // pred_check
      _
    $region35: #{tpu_custom_call.1} parent=1 // pred_check_branch
      %63 = sbr.rel (0) target = $region37
    $region36: #{tpu_custom_call.1} parent=1 // pred_region
      %64 = dma.done [#allocation6], 128
    $region37: #{tpu_custom_call.1} parent=1 // pred_fallthru
      _
    // Predicated region
    $region38: #{tpu_custom_call.1} parent=1 // pred_check
      _
    $region39: #{tpu_custom_call.1} parent=1 // pred_check_branch
      %66 = sbr.rel (0) target = $region41
    $region40: #{tpu_custom_call.1} parent=1 // pred_region
      %67 = dma.done [#allocation6], 256
    $region41: #{tpu_custom_call.1} parent=1 // pred_fallthru
      _
    %v69 = vld [vmem:[#allocation2] sm:$0xff]
    %v70 = vld [vmem:[#allocation2 + $0x8] sm:$0xff]
    %v71 = vpack.c.bf16 %v70, %v69
    %v72 = vld [vmem:[#allocation5] sm:$0xf]
    %v73 = vld [vmem:[#allocation5 + $0x4] sm:$0xf]
    %v74 = vld [vmem:[%s2] sm:$0x1]
    %v76 = vlaneseq
    %v77 = vshrl.u32 %v76, 7
    %v78 = vsub.s32 0, %v77
    %v79 = vrot.slane %v74, %v78
    %v83 = vunpack.c.l.b16 %v72
    %v84 = vunpack.c.l.b16 %v73
    %v85 = vpack.c.b16 %v84, %v83
    %vm87 = vcmask 130048
    %v89 = vsel %vm87, %v71, 0
    %91 = vmatprep.subr.bf16.mxu0 0
    %92 = vmatpush1.bf16.msra.mxu0 %v85
    %93 = vmatprep.subr.bf16.mxu0 0
    %94 = vmatpush1.bf16.msra.mxu0 0
    %95 = vmatprep.subr.bf16.mxu0 0
    %96 = vmatpush1.bf16.msra.mxu0 0
    %97 = vmatprep.subr.bf16.mxu0 0
    %98 = vmatpush1.bf16.msra.mxu0 0
    %99 = vmatprep.subr.bf16.mxu0 0
    %100 = vmatpush1.bf16.msra.mxu0 0
    %101 = vmatprep.subr.bf16.mxu0 0
    %102 = vmatpush1.bf16.msra.mxu0 0
    %103 = vmatprep.subr.bf16.mxu0 0
    %104 = vmatpush1.bf16.msra.mxu0 0
    %105 = vmatprep.subr.bf16.mxu0 0
    %106 = vmatpush1.bf16.msra.mxu0 0
    %107 = vmatprep.subr.bf16.mxu0 0
    %108 = vmatpush1.bf16.msra.mxu0 0
    %109 = vmatprep.subr.bf16.mxu0 0
    %110 = vmatpush1.bf16.msra.mxu0 0
    %111 = vmatprep.subr.bf16.mxu0 0
    %112 = vmatpush1.bf16.msra.mxu0 0
    %113 = vmatprep.subr.bf16.mxu0 0
    %114 = vmatpush1.bf16.msra.mxu0 0
    %115 = vmatprep.subr.bf16.mxu0 0
    %116 = vmatpush1.bf16.msra.mxu0 0
    %117 = vmatprep.subr.bf16.mxu0 0
    %118 = vmatpush1.bf16.msra.mxu0 0
    %119 = vmatprep.subr.bf16.mxu0 0
    %120 = vmatpush1.bf16.msra.mxu0 0
    %121 = vmatprep.subr.bf16.mxu0 0
    %122 = vmatpush1.bf16.msra.mxu0 0
    %123 = vmatprep.mubr.bf16.mxu0 0
    %124 = vmatmul.mubr.bf16.gmra.mrb[0].mxu0 %v89
    %v125 = vpop.f32.mrb[0].mxu0
    %v126 = vadd.f32 %v79, %v125
    %v127 = vpop.f32.mrb[0].mxu0
    %v128 = vpop.f32.mrb[0].mxu0
    %v129 = vadd.f32 %v79, %v128
    %v130 = vpop.f32.mrb[0].mxu0
    %131 = vdwg.mxu0
    %v132 = vxor.u32 %v126, 2147483648
    %v133 = vxor.u32 %v129, 2147483648
    %v134 = vmul.f32 %v132, 1.442695
    %v135 = vpow.pop %v134
    %v136 = vmul.f32 %v133, 1.442695
    %v137 = vpow.pop %v136
    %v138 = vadd.f32 %v135, 1.0
    %v139 = vadd.f32 %v137, 1.0
    %v140 = vrcp.pop %v138
    %v141 = vmul.f32 1.0, %v140
    %v142 = vrcp.pop %v139
    %v143 = vmul.f32 1.0, %v142
    %v144 = vtanh.pop %v126
    %v145 = vtanh.pop %v129
    %148 = vrot.lane.b32.xlu0 %v144, 96
    %v149 = vpop.permute.xlu0 %148
    %150 = vrot.lane.b32.xlu0 %v145, 96
    %v151 = vpop.permute.xlu0 %150
    %v154 = vmul.f32 %v141, %v149
    %v155 = vmul.f32 %v143, %v151
    %v156 = vtanh.pop %v154
    %v157 = vtanh.pop %v155
    %160 = vrot.lane.b32.xlu0 %v156, 64
    %v161 = vpop.permute.xlu0 %160
    %162 = vrot.lane.b32.xlu0 %v157, 64
    %v163 = vpop.permute.xlu0 %162
    %v166 = vmul.f32 %v141, %v161
    %v167 = vmul.f32 %v143, %v163
    %v168 = vpack.c.bf16 %v167, %v166
    %v169 = vld [vmem:[#allocation7] sm:$0xf]
    %v170 = vld [vmem:[#allocation7 + $0x4] sm:$0xf]
    %v171 = vld [vmem:[#allocation7 + $0x8] sm:$0xf]
    %v172 = vld [vmem:[#allocation7 + $0xc] sm:$0xf]
    %v173 = vld [vmem:[%s4] sm:$0x1]
    %v175 = vlaneseq
    %v176 = vshrl.u32 %v175, 7
    %v177 = vsub.s32 0, %v176
    %v178 = vrot.slane %v173, %v177
    %181 = vrot.lane.b32.xlu0 %v168, 64
    %v182 = vpop.permute.xlu0 %181
    %v187 = vunpack.c.l.b16 %v169
    %v188 = vunpack.c.l.b16 %v170
    %v189 = vunpack.c.l.b16 %v171
    %v190 = vunpack.c.l.b16 %v172
    %v191 = vpack.c.b16 %v188, %v187
    %v192 = vpack.c.b16 %v190, %v189
    %vm195 = vcmask 261120
    %v197 = vsel %vm195, %v182, 0
    %199 = vmatprep.subr.bf16.mxu0 0
    %200 = vmatpush1.bf16.msra.mxu0 %v191
    %201 = vmatprep.subr.bf16.mxu0 0
    %202 = vmatpush1.bf16.msra.mxu0 %v192
    %203 = vmatprep.subr.bf16.mxu0 0
    %204 = vmatpush1.bf16.msra.mxu0 0
    %205 = vmatprep.subr.bf16.mxu0 0
    %206 = vmatpush1.bf16.msra.mxu0 0
    %207 = vmatprep.subr.bf16.mxu0 0
    %208 = vmatpush1.bf16.msra.mxu0 0
    %209 = vmatprep.subr.bf16.mxu0 0
    %210 = vmatpush1.bf16.msra.mxu0 0
    %211 = vmatprep.subr.bf16.mxu0 0
    %212 = vmatpush1.bf16.msra.mxu0 0
    %213 = vmatprep.subr.bf16.mxu0 0
    %214 = vmatpush1.bf16.msra.mxu0 0
    %215 = vmatprep.subr.bf16.mxu0 0
    %216 = vmatpush1.bf16.msra.mxu0 0
    %217 = vmatprep.subr.bf16.mxu0 0
    %218 = vmatpush1.bf16.msra.mxu0 0
    %219 = vmatprep.subr.bf16.mxu0 0
    %220 = vmatpush1.bf16.msra.mxu0 0
    %221 = vmatprep.subr.bf16.mxu0 0
    %222 = vmatpush1.bf16.msra.mxu0 0
    %223 = vmatprep.subr.bf16.mxu0 0
    %224 = vmatpush1.bf16.msra.mxu0 0
    %225 = vmatprep.subr.bf16.mxu0 0
    %226 = vmatpush1.bf16.msra.mxu0 0
    %227 = vmatprep.subr.bf16.mxu0 0
    %228 = vmatpush1.bf16.msra.mxu0 0
    %229 = vmatprep.subr.bf16.mxu0 0
    %230 = vmatpush1.bf16.msra.mxu0 0
    %231 = vmatprep.mubr.bf16.mxu0 0
    %232 = vmatmul.mubr.bf16.gmra.mrb[0].mxu0 %v197
    %v233 = vpop.f32.mrb[0].mxu0
    %v234 = vadd.f32 %v178, %v233
    %v235 = vpop.f32.mrb[0].mxu0
    %v236 = vpop.f32.mrb[0].mxu0
    %v237 = vadd.f32 %v178, %v236
    %v238 = vpop.f32.mrb[0].mxu0
    %239 = vdwg.mxu0
    %v240 = vxor.u32 %v234, 2147483648
    %v241 = vxor.u32 %v237, 2147483648
    %v242 = vmul.f32 %v240, 1.442695
    %v243 = vpow.pop %v242
    %v244 = vmul.f32 %v241, 1.442695
    %v245 = vpow.pop %v244
    %v246 = vadd.f32 %v243, 1.0
    %v247 = vadd.f32 %v245, 1.0
    %v248 = vrcp.pop %v246
    %v249 = vmul.f32 1.0, %v248
    %v250 = vrcp.pop %v247
    %v251 = vmul.f32 1.0, %v250
    %v252 = vtanh.pop %v234
    %v253 = vtanh.pop %v237
    %256 = vrot.lane.b32.xlu0 %v252, 96
    %v257 = vpop.permute.xlu0 %256
    %258 = vrot.lane.b32.xlu0 %v253, 96
    %v259 = vpop.permute.xlu0 %258
    %v262 = vmul.f32 %v249, %v257
    %v263 = vmul.f32 %v251, %v259
    %v264 = vtanh.pop %v262
    %v265 = vtanh.pop %v263
    %268 = vrot.lane.b32.xlu0 %v264, 64
    %v269 = vpop.permute.xlu0 %268
    %270 = vrot.lane.b32.xlu0 %v265, 64
    %v271 = vpop.permute.xlu0 %270
    %v274 = vmul.f32 %v249, %v269
    %v275 = vmul.f32 %v251, %v271
    %v276 = vpack.c.bf16 %v275, %v274
    %v277 = vld [vmem:[%s5] sm:$0xf]
    %v278 = vld [vmem:[%s5 + $0x4] sm:$0xf]
    %v279 = vld [vmem:[%s5 + $0x8] sm:$0xf]
    %v280 = vld [vmem:[%s5 + $0xc] sm:$0xf]
    %v281 = vld [vmem:[%s6] sm:$0x1]
    %v283 = vlaneseq
    %v284 = vshrl.u32 %v283, 7
    %v285 = vsub.s32 0, %v284
    %v286 = vrot.slane %v281, %v285
    %289 = vrot.lane.b32.xlu0 %v276, 64
    %v290 = vpop.permute.xlu0 %289
    %v295 = vunpack.c.l.b16 %v277
    %v296 = vunpack.c.l.b16 %v278
    %v297 = vunpack.c.l.b16 %v279
    %v298 = vunpack.c.l.b16 %v280
    %v299 = vpack.c.b16 %v296, %v295
    %v300 = vpack.c.b16 %v298, %v297
    %v304 = vsel %vm195, %v290, 0
    %306 = vmatprep.subr.bf16.mxu0 0
    %307 = vmatpush1.bf16.msra.mxu0 %v299
    %308 = vmatprep.subr.bf16.mxu0 0
    %309 = vmatpush1.bf16.msra.mxu0 %v300
    %310 = vmatprep.subr.bf16.mxu0 0
    %311 = vmatpush1.bf16.msra.mxu0 0
    %312 = vmatprep.subr.bf16.mxu0 0
    %313 = vmatpush1.bf16.msra.mxu0 0
    %314 = vmatprep.subr.bf16.mxu0 0
    %315 = vmatpush1.bf16.msra.mxu0 0
    %316 = vmatprep.subr.bf16.mxu0 0
    %317 = vmatpush1.bf16.msra.mxu0 0
    %318 = vmatprep.subr.bf16.mxu0 0
    %319 = vmatpush1.bf16.msra.mxu0 0
    %320 = vmatprep.subr.bf16.mxu0 0
    %321 = vmatpush1.bf16.msra.mxu0 0
    %322 = vmatprep.subr.bf16.mxu0 0
    %323 = vmatpush1.bf16.msra.mxu0 0
    %324 = vmatprep.subr.bf16.mxu0 0
    %325 = vmatpush1.bf16.msra.mxu0 0
    %326 = vmatprep.subr.bf16.mxu0 0
    %327 = vmatpush1.bf16.msra.mxu0 0
    %328 = vmatprep.subr.bf16.mxu0 0
    %329 = vmatpush1.bf16.msra.mxu0 0
    %330 = vmatprep.subr.bf16.mxu0 0
    %331 = vmatpush1.bf16.msra.mxu0 0
    %332 = vmatprep.subr.bf16.mxu0 0
    %333 = vmatpush1.bf16.msra.mxu0 0
    %334 = vmatprep.subr.bf16.mxu0 0
    %335 = vmatpush1.bf16.msra.mxu0 0
    %336 = vmatprep.subr.bf16.mxu0 0
    %337 = vmatpush1.bf16.msra.mxu0 0
    %338 = vmatprep.mubr.bf16.mxu0 0
    %339 = vmatmul.mubr.bf16.gmra.mrb[0].mxu0 %v304
    %v340 = vpop.f32.mrb[0].mxu0
    %v341 = vadd.f32 %v286, %v340
    %v342 = vpop.f32.mrb[0].mxu0
    %v343 = vpop.f32.mrb[0].mxu0
    %v344 = vadd.f32 %v286, %v343
    %v345 = vpop.f32.mrb[0].mxu0
    %346 = vdwg.mxu0
    %v347 = vpack.c.bf16 %v344, %v341
    %v349 = vunpack.c.l.b16 %v347
    %v350 = vunpack.c.h.b16 %v347
    %v351 = vpack.c.b16 %v349, %v349
    %v352 = vpack.c.b16 %v350, %v350
    %355 = vst [vmem:[#allocation8] sm:$0xf] %v351
    %356 = vst [vmem:[#allocation8 + $0x4] sm:$0xf] %v352
    // Predicated region
    $region42: #{tpu_custom_call.1} parent=1 // pred_check
      _
    $region43: #{tpu_custom_call.1} parent=1 // pred_check_branch
      %358 = sbr.rel (0) target = $region45
    $region44: #{tpu_custom_call.1} parent=1 // pred_region
      %s360 = ssub.s32 128, 128
      %361 = vsyncadd [#allocation4], %s360
      %s362 = sshll.u32 [#allocation8], 4
      %s363 = int_to_ptr.vmem [resolvable:$true] %s362
      %368 = dma.vmem_to_hbm [thread:$0]  %s363, 128, %s7, [#allocation4], 64, 64, 4
    $region45: #{tpu_custom_call.1} parent=1 // pred_fallthru
      _
    // Predicated region
    $region46: #{tpu_custom_call.1} parent=1 // pred_check
      _
    $region47: #{tpu_custom_call.1} parent=1 // pred_check_branch
      %370 = sbr.rel (0) target = $region49
    $region48: #{tpu_custom_call.1} parent=1 // pred_region
      %371 = dma.done [#allocation4], 128
    $region49: #{tpu_custom_call.1} parent=1 // pred_fallthru
      _
    %372 = vsyncpa [#allocation3], 1
    %373 = vsyncpa [#allocation6], 1
    %374 = vsyncpa [#allocation4], 1

</llo_original>
